<compile_context>
chip_gen: v7x
topology: tpu7x:2x2x1
jax: 0.10.0
libtpu: 0.0.40
codegen_flags: <defaults>
</compile_context>

<pallas_src>
import jax
import jax.numpy as jnp
from jax.experimental import pallas as pl
from jax.experimental.pallas import tpu as pltpu


def _round_up(x: int, m: int) -> int:
    return (x + m - 1) // m * m


def _pad2d(a, rows, cols):
    return jnp.pad(a, ((0, rows - a.shape[0]), (0, cols - a.shape[1])))


def _critic_kernel(s_ref, a_ref, w1s_ref, w1a_ref, w2_ref, w3_ref, misc_ref, o_ref):
    # s: [TB, S] f32, a: [TB, A] f32, w1s/w1a/w2/w3: bf16,
    # misc: [8, Hp] f32 packed rows -> 0: b1, 1: b2, 2: b3, 3: w4 row, 4: b4.
    s = s_ref[...].astype(jnp.bfloat16)   # in-kernel cast (cheap VPU work)
    a = a_ref[...].astype(jnp.bfloat16)

    h = (jnp.dot(s, w1s_ref[...], preferred_element_type=jnp.float32)
         + jnp.dot(a, w1a_ref[...], preferred_element_type=jnp.float32)
         + misc_ref[0:1, :])
    h = jnp.maximum(h, 0.0)
    h = jnp.dot(h.astype(jnp.bfloat16), w2_ref[...],
                preferred_element_type=jnp.float32) + misc_ref[1:2, :]
    h = jnp.maximum(h, 0.0)
    h = jnp.dot(h.astype(jnp.bfloat16), w3_ref[...],
                preferred_element_type=jnp.float32) + misc_ref[2:3, :]
    h = jnp.maximum(h, 0.0)
    # Final [H -> 1] layer: VPU multiply by the (f32) w4 row + lane (XLU) reduce.
    q = jnp.sum(h * misc_ref[3:4, :], axis=-1, keepdims=True)
    o_ref[...] = (q + misc_ref[4:5, 0:1]).astype(o_ref.dtype)


def prepare_critic_params(params, state_dim: int, action_dim: int):
    """Pad/cast/pack the parameters once (outside the per-call path).

    Weights are stored as [in, out] (transpose of torch's [out, in]).
    The hidden axis is zero-padded (128 lanes, or 256 when H > 128 for the
    256-wide MXU on v6e/v7x); padded rows/cols are zeros so they contribute
    nothing to the real outputs.  b1/b2/b3/w4/b4 are packed into one (8, Hp)
    f32 array so they arrive in a single DMA.
    """
    H = params["w2"].shape[0]
    Hp = _round_up(H, 256) if H > 128 else 128
    w1 = params["w1"]  # [S + A, H]

    misc = jnp.zeros((8, Hp), jnp.float32)
    misc = misc.at[0, :H].set(params["b1"].astype(jnp.float32))
    misc = misc.at[1, :H].set(params["b2"].astype(jnp.float32))
    misc = misc.at[2, :H].set(params["b3"].astype(jnp.float32))
    misc = misc.at[3, :H].set(params["w4"][:, 0].astype(jnp.float32))
    misc = misc.at[4, :].set(params["b4"][0].astype(jnp.float32))

    return {
        "w1s": _pad2d(w1[:state_dim, :], state_dim, Hp).astype(jnp.bfloat16),
        "w1a": _pad2d(w1[state_dim:, :], action_dim, Hp).astype(jnp.bfloat16),
        "w2": _pad2d(params["w2"], Hp, Hp).astype(jnp.bfloat16),
        "w3": _pad2d(params["w3"], Hp, Hp).astype(jnp.bfloat16),
        "misc": misc,
    }


def _pick_tile_batch(B: int) -> int:
    """Batch tile: multiple of 16 (bf16 sublane packing), minimal padding waste,
    and >=2 grid steps for large batches so v7x megacore shards across both TCs."""
    if B <= 128:
        return max(16, _round_up(B, 16))
    best = None
    for tb in (1024, 512, 256, 128):
        bp = _round_up(B, tb)
        if B >= 512 and bp // tb < 2:
            continue  # would leave one v7x TensorCore idle
        key = (bp - B, -tb)  # minimize padding; among ties prefer the larger tile
        if best is None or key < best[0]:
            best = (key, tb)
    return best[1]


@jax.jit
def critic_forward(state, action, prepared):
    """Pallas implementation of Critic.forward(state, action) -> [B, 1] (f32)."""
    B, S = state.shape
    A = action.shape[1]
    assert S == prepared["w1s"].shape[0], "state_dim mismatch with prepared params"
    assert A == prepared["w1a"].shape[0], "action_dim mismatch with prepared params"
    Hp = prepared["w2"].shape[0]

    TB = _pick_tile_batch(B)
    Bp = _round_up(B, TB)
    # No dtype cast here (done in-kernel); pad batch rows only when needed.
    s_p = state if Bp == B else jnp.pad(state, ((0, Bp - B), (0, 0)))
    a_p = action if Bp == B else jnp.pad(action, ((0, Bp - B), (0, 0)))

    def resident(shape):
        # Constant index_map -> VMEM-resident across the grid; single-buffered
        # (double-buffering a constant block is pure VMEM waste).
        return pl.BlockSpec(shape, lambda i: (0, 0), pipeline_mode=pl.Buffered(1))

    # Explicit VMEM budget: streamed tiles (double-buffered) + single-buffered
    # weights + f32 activation temporaries, with generous headroom; capped at
    # 64 MiB so it stays legal on v7x.
    vmem_bytes = (
        2 * TB * (S + A) * 4      # double-buffered f32 input tiles
        + 2 * TB * 4              # double-buffered output tile
        + (S + A) * Hp * 2        # w1 split (bf16, single-buffered)
        + 2 * Hp * Hp * 2         # w2 + w3 (bf16, single-buffered)
        + 8 * Hp * 4              # packed biases / w4 row
        + 4 * TB * Hp * 4         # in-flight f32 activations
    )
    vmem_limit = int(min(64 << 20, max(2 * vmem_bytes + (4 << 20), 16 << 20)))
    # TODO(synk): for Hp >= ~2048 on v7x, add a grid axis tiling Hp so the full
    # Hp x Hp weights need not stay VMEM-resident.

    out = pl.pallas_call(
        _critic_kernel,
        out_shape=jax.ShapeDtypeStruct((Bp, 1), jnp.float32),
        grid=(Bp // TB,),
        in_specs=[
            pl.BlockSpec((TB, S), lambda i: (i, 0)),   # state tile (streamed)
            pl.BlockSpec((TB, A), lambda i: (i, 0)),   # action tile (streamed)
            resident((S, Hp)),      # w1_state
            resident((A, Hp)),      # w1_action
            resident((Hp, Hp)),     # w2
            resident((Hp, Hp)),     # w3
            resident((8, Hp)),      # packed b1/b2/b3/w4/b4
        ],
        out_specs=pl.BlockSpec((TB, 1), lambda i: (i, 0)),
        compiler_params=pltpu.CompilerParams(
            dimension_semantics=("parallel",),
            vmem_limit_bytes=vmem_limit),
    )(s_p, a_p, prepared["w1s"], prepared["w1a"],
      prepared["w2"], prepared["w3"], prepared["misc"])

    return out[:B]


def init_critic_params(key, state_dim, action_dim, hidden_dim):
    """Mimics PyTorch nn.Linear default init (U[-1/sqrt(fan_in), 1/sqrt(fan_in)]).
    Weights stored as [in, out]."""
    dims = [(state_dim + action_dim, hidden_dim),
            (hidden_dim, hidden_dim),
            (hidden_dim, hidden_dim),
            (hidden_dim, 1)]
    params = {}
    for i, (fan_in, fan_out) in enumerate(dims, start=1):
        key, kw, kb = jax.random.split(key, 3)
        bound = 1.0 / jnp.sqrt(float(fan_in))
        params[f"w{i}"] = jax.random.uniform(kw, (fan_in, fan_out), jnp.float32,
                                             minval=-bound, maxval=bound)
        params[f"b{i}"] = jax.random.uniform(kb, (fan_out,), jnp.float32,
                                             minval=-bound, maxval=bound)
    return params


def _reference_forward(state, action, params):
    x = jnp.concatenate([state, action], axis=-1)
    h = jnp.maximum(x @ params["w1"] + params["b1"], 0.0)
    h = jnp.maximum(h @ params["w2"] + params["b2"], 0.0)
    h = jnp.maximum(h @ params["w3"] + params["b3"], 0.0)
    return h @ params["w4"] + params["b4"]


if __name__ == "__main__":
    state_dim, action_dim, hidden_dim, batch = 12, 4, 32, 8

    key = jax.random.PRNGKey(0)
    key, ks, ka, kp = jax.random.split(key, 4)
    state = jax.random.normal(ks, (batch, state_dim), jnp.float32)
    action = jax.random.normal(ka, (batch, action_dim), jnp.float32)
    params = init_critic_params(kp, state_dim, action_dim, hidden_dim)

    prepared = prepare_critic_params(params, state_dim, action_dim)
    q = critic_forward(state, action, prepared)
    jax.block_until_ready(q)

    q_ref = _reference_forward(state, action, params)
    assert q.shape == (batch, 1), q.shape
    # bf16 weights/activations vs. f32 reference -> loose tolerance.
    assert jnp.allclose(q, q_ref, atol=2e-2, rtol=2e-2), (q, q_ref)

    print("KERNEL_OK")
</pallas_src>

<mosaic_0001>
module attributes {stable_mosaic.version = 11 : i64} {
  func.func @_critic_kernel(%arg0: i32, %arg1: memref<16x12xf32, #tpu.memory_space<vmem>>, %arg2: memref<16x4xf32, #tpu.memory_space<vmem>>, %arg3: memref<12x128xbf16, #tpu.memory_space<vmem>>, %arg4: memref<4x128xbf16, #tpu.memory_space<vmem>>, %arg5: memref<128x128xbf16, #tpu.memory_space<vmem>>, %arg6: memref<128x128xbf16, #tpu.memory_space<vmem>>, %arg7: memref<8x128xf32, #tpu.memory_space<vmem>>, %arg8: memref<16x1xf32, #tpu.memory_space<vmem>>) attributes {dimension_semantics = [#tpu.dimension_semantics<parallel>], iteration_bounds = array<i64: 1>, scalar_prefetch = 0 : i64, scratch_operands = 0 : i64, tpu.core_type = #tpu.core_type<tc>, window_params = [{transform_indices = @transform_0, window_bounds = array<i64: 16, 12>}, {transform_indices = @transform_1, window_bounds = array<i64: 16, 4>}, {pipeline_mode = #tpu.pipeline_mode<synchronous>, transform_indices = @transform_2, window_bounds = array<i64: 12, 128>}, {pipeline_mode = #tpu.pipeline_mode<synchronous>, transform_indices = @transform_3, window_bounds = array<i64: 4, 128>}, {pipeline_mode = #tpu.pipeline_mode<synchronous>, transform_indices = @transform_4, window_bounds = array<i64: 128, 128>}, {pipeline_mode = #tpu.pipeline_mode<synchronous>, transform_indices = @transform_5, window_bounds = array<i64: 128, 128>}, {pipeline_mode = #tpu.pipeline_mode<synchronous>, transform_indices = @transform_6, window_bounds = array<i64: 8, 128>}, {transform_indices = @transform_7, window_bounds = array<i64: 16, 1>}]} {
    %c0 = arith.constant 0 : index
    %c0_0 = arith.constant 0 : index
    %0 = vector.load %arg1[%c0, %c0_0] : memref<16x12xf32, #tpu.memory_space<vmem>>, vector<16x12xf32>
    %1 = arith.truncf %0 : vector<16x12xf32> to vector<16x12xbf16>
    %c0_1 = arith.constant 0 : index
    %c0_2 = arith.constant 0 : index
    %2 = vector.load %arg2[%c0_1, %c0_2] : memref<16x4xf32, #tpu.memory_space<vmem>>, vector<16x4xf32>
    %3 = arith.truncf %2 : vector<16x4xf32> to vector<16x4xbf16>
    %c0_3 = arith.constant 0 : index
    %c0_4 = arith.constant 0 : index
    %4 = vector.load %arg3[%c0_3, %c0_4] : memref<12x128xbf16, #tpu.memory_space<vmem>>, vector<12x128xbf16>
    %cst = arith.constant dense<0.000000e+00> : vector<16x128xf32>
    %5 = tpu.matmul %1, %4, %cst {dimension_numbers = #tpu.dot_dimension_numbers<[1], [0], [0], [1], [0, 0, 1, 1], [], []>} : vector<16x12xbf16>, vector<12x128xbf16>, vector<16x128xf32> -> vector<16x128xf32>
    %c0_5 = arith.constant 0 : index
    %c0_6 = arith.constant 0 : index
    %6 = vector.load %arg4[%c0_5, %c0_6] : memref<4x128xbf16, #tpu.memory_space<vmem>>, vector<4x128xbf16>
    %cst_7 = arith.constant dense<0.000000e+00> : vector<16x128xf32>
    %7 = tpu.matmul %3, %6, %cst_7 {dimension_numbers = #tpu.dot_dimension_numbers<[1], [0], [0], [1], [0, 0, 1, 1], [], []>} : vector<16x4xbf16>, vector<4x128xbf16>, vector<16x128xf32> -> vector<16x128xf32>
    %8 = arith.addf %5, %7 : vector<16x128xf32>
    %c0_8 = arith.constant 0 : index
    %c0_9 = arith.constant 0 : index
    %9 = vector.load %arg7[%c0_8, %c0_9] : memref<8x128xf32, #tpu.memory_space<vmem>>, vector<1x128xf32>
    %10 = vector.broadcast %9 : vector<1x128xf32> to vector<16x128xf32>
    %11 = arith.addf %8, %10 : vector<16x128xf32>
    %cst_10 = arith.constant 0.000000e+00 : f32
    %12 = vector.broadcast %cst_10 : f32 to vector<16x128xf32>
    %13 = arith.maximumf %11, %12 : vector<16x128xf32>
    %14 = arith.truncf %13 : vector<16x128xf32> to vector<16x128xbf16>
    %c0_11 = arith.constant 0 : index
    %c0_12 = arith.constant 0 : index
    %15 = vector.load %arg5[%c0_11, %c0_12] : memref<128x128xbf16, #tpu.memory_space<vmem>>, vector<128x128xbf16>
    %cst_13 = arith.constant dense<0.000000e+00> : vector<16x128xf32>
    %16 = tpu.matmul %14, %15, %cst_13 {dimension_numbers = #tpu.dot_dimension_numbers<[1], [0], [0], [1], [0, 0, 1, 1], [], []>} : vector<16x128xbf16>, vector<128x128xbf16>, vector<16x128xf32> -> vector<16x128xf32>
    %c1 = arith.constant 1 : index
    %c0_14 = arith.constant 0 : index
    %17 = vector.load %arg7[%c1, %c0_14] : memref<8x128xf32, #tpu.memory_space<vmem>>, vector<1x128xf32>
    %18 = vector.broadcast %17 : vector<1x128xf32> to vector<16x128xf32>
    %19 = arith.addf %16, %18 : vector<16x128xf32>
    %cst_15 = arith.constant 0.000000e+00 : f32
    %20 = vector.broadcast %cst_15 : f32 to vector<16x128xf32>
    %21 = arith.maximumf %19, %20 : vector<16x128xf32>
    %22 = arith.truncf %21 : vector<16x128xf32> to vector<16x128xbf16>
    %c0_16 = arith.constant 0 : index
    %c0_17 = arith.constant 0 : index
    %23 = vector.load %arg6[%c0_16, %c0_17] : memref<128x128xbf16, #tpu.memory_space<vmem>>, vector<128x128xbf16>
    %cst_18 = arith.constant dense<0.000000e+00> : vector<16x128xf32>
    %24 = tpu.matmul %22, %23, %cst_18 {dimension_numbers = #tpu.dot_dimension_numbers<[1], [0], [0], [1], [0, 0, 1, 1], [], []>} : vector<16x128xbf16>, vector<128x128xbf16>, vector<16x128xf32> -> vector<16x128xf32>
    %c2 = arith.constant 2 : index
    %c0_19 = arith.constant 0 : index
    %25 = vector.load %arg7[%c2, %c0_19] : memref<8x128xf32, #tpu.memory_space<vmem>>, vector<1x128xf32>
    %26 = vector.broadcast %25 : vector<1x128xf32> to vector<16x128xf32>
    %27 = arith.addf %24, %26 : vector<16x128xf32>
    %cst_20 = arith.constant 0.000000e+00 : f32
    %28 = vector.broadcast %cst_20 : f32 to vector<16x128xf32>
    %29 = arith.maximumf %27, %28 : vector<16x128xf32>
    %c3 = arith.constant 3 : index
    %c0_21 = arith.constant 0 : index
    %30 = vector.load %arg7[%c3, %c0_21] : memref<8x128xf32, #tpu.memory_space<vmem>>, vector<1x128xf32>
    %31 = vector.broadcast %30 : vector<1x128xf32> to vector<16x128xf32>
    %32 = arith.mulf %29, %31 : vector<16x128xf32>
    %cst_22 = arith.constant dense<0.000000e+00> : vector<16xf32>
    %33 = vector.multi_reduction <add>, %32, %cst_22 [1] : vector<16x128xf32> to vector<16xf32>
    %34 = vector.shape_cast %33 : vector<16xf32> to vector<16x1xf32>
    %c4 = arith.constant 4 : index
    %c0_23 = arith.constant 0 : index
    %35 = vector.load %arg7[%c4, %c0_23] : memref<8x128xf32, #tpu.memory_space<vmem>>, vector<1x1xf32>
    %36 = vector.broadcast %35 : vector<1x1xf32> to vector<16x1xf32>
    %37 = arith.addf %34, %36 : vector<16x1xf32>
    %c0_24 = arith.constant 0 : index
    %c0_25 = arith.constant 0 : index
    %38 = vector.load %arg8[%c0_24, %c0_25] : memref<16x1xf32, #tpu.memory_space<vmem>>, vector<16x1xf32>
    tpu.vector_store %arg8[%c0_24, %c0_25], %37 {strides = array<i32>} : memref<16x1xf32, #tpu.memory_space<vmem>>, vector<16x1xf32>,
    return
  }
  func.func @transform_0(%arg0: i32) -> (i32, i32) {
    %c0_i32 = arith.constant 0 : i32
    %c0_i32_0 = arith.constant 0 : i32
    return %arg0, %c0_i32 : i32, i32
  }
  func.func @transform_1(%arg0: i32) -> (i32, i32) {
    %c0_i32 = arith.constant 0 : i32
    %c0_i32_0 = arith.constant 0 : i32
    return %arg0, %c0_i32 : i32, i32
  }
  func.func @transform_2(%arg0: i32) -> (i32, i32) {
    %c0_i32 = arith.constant 0 : i32
    %c0_i32_0 = arith.constant 0 : i32
    %c0_i32_1 = arith.constant 0 : i32
    return %c0_i32, %c0_i32_0 : i32, i32
  }
  func.func @transform_3(%arg0: i32) -> (i32, i32) {
    %c0_i32 = arith.constant 0 : i32
    %c0_i32_0 = arith.constant 0 : i32
    %c0_i32_1 = arith.constant 0 : i32
    return %c0_i32, %c0_i32_0 : i32, i32
  }
  func.func @transform_4(%arg0: i32) -> (i32, i32) {
    %c0_i32 = arith.constant 0 : i32
    %c0_i32_0 = arith.constant 0 : i32
    %c0_i32_1 = arith.constant 0 : i32
    return %c0_i32, %c0_i32_0 : i32, i32
  }
  func.func @transform_5(%arg0: i32) -> (i32, i32) {
    %c0_i32 = arith.constant 0 : i32
    %c0_i32_0 = arith.constant 0 : i32
    %c0_i32_1 = arith.constant 0 : i32
    return %c0_i32, %c0_i32_0 : i32, i32
  }
  func.func @transform_6(%arg0: i32) -> (i32, i32) {
    %c0_i32 = arith.constant 0 : i32
    %c0_i32_0 = arith.constant 0 : i32
    %c0_i32_1 = arith.constant 0 : i32
    return %c0_i32, %c0_i32_0 : i32, i32
  }
  func.func @transform_7(%arg0: i32) -> (i32, i32) {
    %c0_i32 = arith.constant 0 : i32
    %c0_i32_0 = arith.constant 0 : i32
    return %arg0, %c0_i32 : i32, i32
  }
}

</mosaic_0001>

<llo_original>
// kernel: critic_forward.1
$region0: #{critic_forward.1}
  #allocation0 [shape = 'u32[]', space=smem, size = 0x4, offset = 0x4, fixed_abs, tag = 'smem constant byte address 0x4 - core index']
  #allocation1 [shape = 'u32[144,128]{1,0:T(1,128)}', space=vmem, size = 0x12000, scoped, tag = 'internal scratch']
  %s0 = inlined_call_operand.vmem [shape: f32[16,12], index: 0, kind: input, shape index: {}]
  %s1 = inlined_call_operand.vmem [shape: f32[16,4], index: 1, kind: input, shape index: {}]
  %s2 = inlined_call_operand.vmem [shape: bf16[12,128], index: 2, kind: input, shape index: {}]
  %s3 = inlined_call_operand.hbm [shape: bf16[4,128], index: 3, kind: input, shape index: {}]
  %s4 = inlined_call_operand.vmem [shape: bf16[128,128], index: 4, kind: input, shape index: {}]
  %s5 = inlined_call_operand.hbm [shape: bf16[128,128], index: 5, kind: input, shape index: {}]
  %s6 = inlined_call_operand.vmem [shape: f32[8,128], index: 6, kind: input, shape index: {}]
  %s7 = inlined_call_operand.vmem [shape: f32[16,1], index: 7, kind: output, shape index: {}]
  %s8 = sld [smem:[#allocation0]]
  $region46: #{critic_forward.1} parent=0
    _
  %s10 = ssub.s32 1, %s8
  %s11 = scalar_select 0, %s10, %s8
  $region1: #{critic_forward.1} parent=0
    #allocation2 [shape = 'u8[1024]{0}', space=vmem, size = 0x400, scoped, tag = 'input window, operand 3, single buffered']
    #allocation3 [shape = 's32[1]{0}', space=sflag, size = 0x4, scoped, tag = 'scoped memory for critic_forward.1']
    #allocation4 [shape = 'u8[32768]{0}', space=vmem, size = 0x8000, scoped, tag = 'input window, operand 5, single buffered']
    #allocation5 [shape = 's32[1]{0}', space=sflag, size = 0x4, scoped, tag = 'scoped memory for critic_forward.1']
    %12 = vsyncpa [#allocation3], 0
    %13 = vsyncpa [#allocation5], 0
    // Predicated region
    $region2: #{critic_forward.1} parent=1 // pred_check
      _
    $region3: #{critic_forward.1} parent=1 // pred_check_branch
      %15 = sbr.rel (0) target = $region5
    $region4: #{critic_forward.1} parent=1 // pred_region
      _
    $region5: #{critic_forward.1} parent=1 // pred_fallthru
      _
    // Predicated region
    $region6: #{critic_forward.1} parent=1 // pred_check
      _
    $region7: #{critic_forward.1} parent=1 // pred_check_branch
      %17 = sbr.rel (0) target = $region9
    $region8: #{critic_forward.1} parent=1 // pred_region
      _
    $region9: #{critic_forward.1} parent=1 // pred_fallthru
      _
    // Predicated region
    $region10: #{critic_forward.1} parent=1 // pred_check
      _
    $region11: #{critic_forward.1} parent=1 // pred_check_branch
      %19 = sbr.rel (0) target = $region13
    $region12: #{critic_forward.1} parent=1 // pred_region
      _
    $region13: #{critic_forward.1} parent=1 // pred_fallthru
      _
    // Predicated region
    $region14: #{critic_forward.1} parent=1 // pred_check
      _
    $region15: #{critic_forward.1} parent=1 // pred_check_branch
      %21 = sbr.rel (0) target = $region17
    $region16: #{critic_forward.1} parent=1 // pred_region
      %s23 = ssub.s32 32, 32
      %24 = vsyncadd [#allocation3], %s23
      %s26 = sshll.u32 [#allocation2], 4
      %s27 = int_to_ptr.vmem [resolvable:$true] %s26
      %29 = dma.hbm_to_vmem [thread:$0]  %s3, 32, %s27, [#allocation3]
    $region17: #{critic_forward.1} parent=1 // pred_fallthru
      _
    // Predicated region
    $region18: #{critic_forward.1} parent=1 // pred_check
      _
    $region19: #{critic_forward.1} parent=1 // pred_check_branch
      %31 = sbr.rel (0) target = $region21
    $region20: #{critic_forward.1} parent=1 // pred_region
      _
    $region21: #{critic_forward.1} parent=1 // pred_fallthru
      _
    // Predicated region
    $region22: #{critic_forward.1} parent=1 // pred_check
      _
    $region23: #{critic_forward.1} parent=1 // pred_check_branch
      %33 = sbr.rel (0) target = $region25
    $region24: #{critic_forward.1} parent=1 // pred_region
      %s35 = ssub.s32 1024, 1024
      %36 = vsyncadd [#allocation5], %s35
      %s37 = sshll.u32 [#allocation4], 4
      %s38 = int_to_ptr.vmem [resolvable:$true] %s37
      %43 = dma.hbm_to_vmem [thread:$0]  %s5, 1024, %s38, [#allocation5], 64, 64, 4
    $region25: #{critic_forward.1} parent=1 // pred_fallthru
      _
    // Predicated region
    $region26: #{critic_forward.1} parent=1 // pred_check
      _
    $region27: #{critic_forward.1} parent=1 // pred_check_branch
      %45 = sbr.rel (0) target = $region29
    $region28: #{critic_forward.1} parent=1 // pred_region
      _
    $region29: #{critic_forward.1} parent=1 // pred_fallthru
      _
    // Predicated region
    $region30: #{critic_forward.1} parent=1 // pred_check
      _
    $region31: #{critic_forward.1} parent=1 // pred_check_branch
      %47 = sbr.rel (0) target = $region33
    $region32: #{critic_forward.1} parent=1 // pred_region
      %48 = dma.done [#allocation3], 32
    $region33: #{critic_forward.1} parent=1 // pred_fallthru
      _
    // Predicated region
    $region34: #{critic_forward.1} parent=1 // pred_check
      _
    $region35: #{critic_forward.1} parent=1 // pred_check_branch
      %50 = sbr.rel (0) target = $region37
    $region36: #{critic_forward.1} parent=1 // pred_region
      %51 = dma.done [#allocation5], 1024
    $region37: #{critic_forward.1} parent=1 // pred_fallthru
      _
    %v53 = vld [vmem:[%s0] sm:$0xff]
    %v54 = vld [vmem:[%s0 + $0x8] sm:$0xff]
    %v55 = vpack.c.bf16 %v54, %v53
    %v56 = vld [vmem:[%s1] sm:$0xff]
    %v57 = vld [vmem:[%s1 + $0x8] sm:$0xff]
    %v58 = vpack.c.bf16 %v57, %v56
    %v59 = vld [vmem:[%s2] sm:$0xf]
    %v60 = vld [vmem:[%s2 + $0x4] sm:$0x3]
    %v61 = vld [vmem:[#allocation2] sm:$0x3]
    %vm62 = vcmask 31744
    %v64 = vsel %vm62, %v58, 0
    %vm66 = vcmask 1041408
    %v68 = vsel %vm66, %v61, 0
    %70 = vmatprep.subr.bf16.mxu0 0
    %71 = vmatpush1.bf16.msra.mxu0 %v68
    %72 = vmatprep.subr.bf16.mxu0 0
    %73 = vmatpush1.bf16.msra.mxu0 0
    %74 = vmatprep.subr.bf16.mxu0 0
    %75 = vmatpush1.bf16.msra.mxu0 0
    %76 = vmatprep.subr.bf16.mxu0 0
    %77 = vmatpush1.bf16.msra.mxu0 0
    %78 = vmatprep.subr.bf16.mxu0 0
    %79 = vmatpush1.bf16.msra.mxu0 0
    %80 = vmatprep.subr.bf16.mxu0 0
    %81 = vmatpush1.bf16.msra.mxu0 0
    %82 = vmatprep.subr.bf16.mxu0 0
    %83 = vmatpush1.bf16.msra.mxu0 0
    %84 = vmatprep.subr.bf16.mxu0 0
    %85 = vmatpush1.bf16.msra.mxu0 0
    %86 = vmatprep.subr.bf16.mxu0 0
    %87 = vmatpush1.bf16.msra.mxu0 0
    %88 = vmatprep.subr.bf16.mxu0 0
    %89 = vmatpush1.bf16.msra.mxu0 0
    %90 = vmatprep.subr.bf16.mxu0 0
    %91 = vmatpush1.bf16.msra.mxu0 0
    %92 = vmatprep.subr.bf16.mxu0 0
    %93 = vmatpush1.bf16.msra.mxu0 0
    %94 = vmatprep.subr.bf16.mxu0 0
    %95 = vmatpush1.bf16.msra.mxu0 0
    %96 = vmatprep.subr.bf16.mxu0 0
    %97 = vmatpush1.bf16.msra.mxu0 0
    %98 = vmatprep.subr.bf16.mxu0 0
    %99 = vmatpush1.bf16.msra.mxu0 0
    %100 = vmatprep.subr.bf16.mxu0 0
    %101 = vmatpush1.bf16.msra.mxu0 0
    %102 = vmatprep.mubr.bf16.mxu0 0
    %103 = vmatmul.mubr.bf16.gmra.mrb[0].mxu0 %v64
    %v104 = vpop.f32.mrb[0].mxu0
    %v105 = vadd.f32 0.0, %v104
    %v106 = vpop.f32.mrb[0].mxu0
    %v107 = vpop.f32.mrb[0].mxu0
    %v108 = vadd.f32 0.0, %v107
    %v109 = vpop.f32.mrb[0].mxu0
    %110 = vdwg.mxu0
    %v113 = vunpack.c.l.b16 %v59
    %v114 = vunpack.c.l.b16 %v60
    %v115 = vpack.c.b16 %v114, %v113
    %vm116 = vcmask 97280
    %v118 = vsel %vm116, %v55, 0
    %vm120 = vcmask 1045504
    %v122 = vsel %vm120, %v115, 0
    %124 = vmatprep.subr.bf16.mxu0 0
    %125 = vmatpush1.bf16.msra.mxu0 %v122
    %126 = vmatprep.subr.bf16.mxu0 0
    %127 = vmatpush1.bf16.msra.mxu0 0
    %128 = vmatprep.subr.bf16.mxu0 0
    %129 = vmatpush1.bf16.msra.mxu0 0
    %130 = vmatprep.subr.bf16.mxu0 0
    %131 = vmatpush1.bf16.msra.mxu0 0
    %132 = vmatprep.subr.bf16.mxu0 0
    %133 = vmatpush1.bf16.msra.mxu0 0
    %134 = vmatprep.subr.bf16.mxu0 0
    %135 = vmatpush1.bf16.msra.mxu0 0
    %136 = vmatprep.subr.bf16.mxu0 0
    %137 = vmatpush1.bf16.msra.mxu0 0
    %138 = vmatprep.subr.bf16.mxu0 0
    %139 = vmatpush1.bf16.msra.mxu0 0
    %140 = vmatprep.subr.bf16.mxu0 0
    %141 = vmatpush1.bf16.msra.mxu0 0
    %142 = vmatprep.subr.bf16.mxu0 0
    %143 = vmatpush1.bf16.msra.mxu0 0
    %144 = vmatprep.subr.bf16.mxu0 0
    %145 = vmatpush1.bf16.msra.mxu0 0
    %146 = vmatprep.subr.bf16.mxu0 0
    %147 = vmatpush1.bf16.msra.mxu0 0
    %148 = vmatprep.subr.bf16.mxu0 0
    %149 = vmatpush1.bf16.msra.mxu0 0
    %150 = vmatprep.subr.bf16.mxu0 0
    %151 = vmatpush1.bf16.msra.mxu0 0
    %152 = vmatprep.subr.bf16.mxu0 0
    %153 = vmatpush1.bf16.msra.mxu0 0
    %154 = vmatprep.subr.bf16.mxu0 0
    %155 = vmatpush1.bf16.msra.mxu0 0
    %156 = vmatprep.mubr.bf16.mxu0 0
    %157 = vmatmul.mubr.bf16.gmra.mrb[0].mxu0 %v118
    %v158 = vpop.f32.mrb[0].mxu0
    %v159 = vadd.f32 %v105, %v158
    %v160 = vpop.f32.mrb[0].mxu0
    %v161 = vpop.f32.mrb[0].mxu0
    %v162 = vadd.f32 %v108, %v161
    %v163 = vpop.f32.mrb[0].mxu0
    %164 = vdwg.mxu0
    %v165 = vld [vmem:[%s6] sm:$0x1]
    %v166 = vlaneseq
    %v167 = vshrl.u32 %v166, 7
    %v168 = vsub.s32 0, %v167
    %v169 = vrot.slane %v165, %v168
    %v170 = vadd.f32 %v159, %v169
    %v171 = vadd.f32 %v162, %v169
    %v172 = vmax.f32 %v170, 0.0
    %v173 = vmax.f32 %v171, 0.0
    %v174 = vpack.c.bf16 %v173, %v172
    %v175 = vld [vmem:[%s4] sm:$0xf]
    %v176 = vld [vmem:[%s4 + $0x4] sm:$0xf]
    %v177 = vld [vmem:[%s4 + $0x8] sm:$0xf]
    %v178 = vld [vmem:[%s4 + $0xc] sm:$0xf]
    %v179 = vld [vmem:[%s4 + $0x10] sm:$0xf]
    %v180 = vld [vmem:[%s4 + $0x14] sm:$0xf]
    %v181 = vld [vmem:[%s4 + $0x18] sm:$0xf]
    %v182 = vld [vmem:[%s4 + $0x1c] sm:$0xf]
    %v183 = vld [vmem:[%s4 + $0x20] sm:$0xf]
    %v184 = vld [vmem:[%s4 + $0x24] sm:$0xf]
    %v185 = vld [vmem:[%s4 + $0x28] sm:$0xf]
    %v186 = vld [vmem:[%s4 + $0x2c] sm:$0xf]
    %v187 = vld [vmem:[%s4 + $0x30] sm:$0xf]
    %v188 = vld [vmem:[%s4 + $0x34] sm:$0xf]
    %v189 = vld [vmem:[%s4 + $0x38] sm:$0xf]
    %v190 = vld [vmem:[%s4 + $0x3c] sm:$0xf]
    %v191 = vld [vmem:[%s6 + $0x1] sm:$0x1]
    %v192 = vlaneseq
    %v193 = vshrl.u32 %v192, 7
    %v194 = vsub.s32 0, %v193
    %v195 = vrot.slane %v191, %v194
    %v212 = vunpack.c.l.b16 %v175
    %v213 = vunpack.c.l.b16 %v176
    %v214 = vunpack.c.l.b16 %v177
    %v215 = vunpack.c.l.b16 %v178
    %v216 = vunpack.c.l.b16 %v179
    %v217 = vunpack.c.l.b16 %v180
    %v218 = vunpack.c.l.b16 %v181
    %v219 = vunpack.c.l.b16 %v182
    %v220 = vunpack.c.l.b16 %v183
    %v221 = vunpack.c.l.b16 %v184
    %v222 = vunpack.c.l.b16 %v185
    %v223 = vunpack.c.l.b16 %v186
    %v224 = vunpack.c.l.b16 %v187
    %v225 = vunpack.c.l.b16 %v188
    %v226 = vunpack.c.l.b16 %v189
    %v227 = vunpack.c.l.b16 %v190
    %v228 = vpack.c.b16 %v213, %v212
    %v229 = vpack.c.b16 %v215, %v214
    %v230 = vpack.c.b16 %v217, %v216
    %v231 = vpack.c.b16 %v219, %v218
    %v232 = vpack.c.b16 %v221, %v220
    %v233 = vpack.c.b16 %v223, %v222
    %v234 = vpack.c.b16 %v225, %v224
    %v235 = vpack.c.b16 %v227, %v226
    %244 = vmatprep.subr.bf16.mxu0 0
    %245 = vmatpush1.bf16.msra.mxu0 %v228
    %246 = vmatprep.subr.bf16.mxu0 0
    %247 = vmatpush1.bf16.msra.mxu0 %v229
    %248 = vmatprep.subr.bf16.mxu0 0
    %249 = vmatpush1.bf16.msra.mxu0 %v230
    %250 = vmatprep.subr.bf16.mxu0 0
    %251 = vmatpush1.bf16.msra.mxu0 %v231
    %252 = vmatprep.subr.bf16.mxu0 0
    %253 = vmatpush1.bf16.msra.mxu0 %v232
    %254 = vmatprep.subr.bf16.mxu0 0
    %255 = vmatpush1.bf16.msra.mxu0 %v233
    %256 = vmatprep.subr.bf16.mxu0 0
    %257 = vmatpush1.bf16.msra.mxu0 %v234
    %258 = vmatprep.subr.bf16.mxu0 0
    %259 = vmatpush1.bf16.msra.mxu0 %v235
    %260 = vmatprep.subr.bf16.mxu0 0
    %261 = vmatpush1.bf16.msra.mxu0 0
    %262 = vmatprep.subr.bf16.mxu0 0
    %263 = vmatpush1.bf16.msra.mxu0 0
    %264 = vmatprep.subr.bf16.mxu0 0
    %265 = vmatpush1.bf16.msra.mxu0 0
    %266 = vmatprep.subr.bf16.mxu0 0
    %267 = vmatpush1.bf16.msra.mxu0 0
    %268 = vmatprep.subr.bf16.mxu0 0
    %269 = vmatpush1.bf16.msra.mxu0 0
    %270 = vmatprep.subr.bf16.mxu0 0
    %271 = vmatpush1.bf16.msra.mxu0 0
    %272 = vmatprep.subr.bf16.mxu0 0
    %273 = vmatpush1.bf16.msra.mxu0 0
    %274 = vmatprep.subr.bf16.mxu0 0
    %275 = vmatpush1.bf16.msra.mxu0 0
    %276 = vmatprep.mubr.bf16.mxu0 0
    %277 = vmatmul.mubr.bf16.gmra.mrb[0].mxu0 %v174
    %v278 = vpop.f32.mrb[0].mxu0
    %v279 = vadd.f32 %v195, %v278
    %v280 = vpop.f32.mrb[0].mxu0
    %v281 = vpop.f32.mrb[0].mxu0
    %v282 = vadd.f32 %v195, %v281
    %v283 = vpop.f32.mrb[0].mxu0
    %284 = vdwg.mxu0
    %v285 = vmax.f32 %v279, 0.0
    %v286 = vmax.f32 %v282, 0.0
    %v287 = vpack.c.bf16 %v286, %v285
    %v288 = vld [vmem:[#allocation4] sm:$0xf]
    %v289 = vld [vmem:[#allocation4 + $0x4] sm:$0xf]
    %v290 = vld [vmem:[#allocation4 + $0x8] sm:$0xf]
    %v291 = vld [vmem:[#allocation4 + $0xc] sm:$0xf]
    %v292 = vld [vmem:[#allocation4 + $0x10] sm:$0xf]
    %v293 = vld [vmem:[#allocation4 + $0x14] sm:$0xf]
    %v294 = vld [vmem:[#allocation4 + $0x18] sm:$0xf]
    %v295 = vld [vmem:[#allocation4 + $0x1c] sm:$0xf]
    %v296 = vld [vmem:[#allocation4 + $0x20] sm:$0xf]
    %v297 = vld [vmem:[#allocation4 + $0x24] sm:$0xf]
    %v298 = vld [vmem:[#allocation4 + $0x28] sm:$0xf]
    %v299 = vld [vmem:[#allocation4 + $0x2c] sm:$0xf]
    %v300 = vld [vmem:[#allocation4 + $0x30] sm:$0xf]
    %v301 = vld [vmem:[#allocation4 + $0x34] sm:$0xf]
    %v302 = vld [vmem:[#allocation4 + $0x38] sm:$0xf]
    %v303 = vld [vmem:[#allocation4 + $0x3c] sm:$0xf]
    %v304 = vld [vmem:[%s6 + $0x2] sm:$0x1]
    %v305 = vlaneseq
    %v306 = vshrl.u32 %v305, 7
    %v307 = vsub.s32 0, %v306
    %v308 = vrot.slane %v304, %v307
    %v325 = vunpack.c.l.b16 %v288
    %v326 = vunpack.c.l.b16 %v289
    %v327 = vunpack.c.l.b16 %v290
    %v328 = vunpack.c.l.b16 %v291
    %v329 = vunpack.c.l.b16 %v292
    %v330 = vunpack.c.l.b16 %v293
    %v331 = vunpack.c.l.b16 %v294
    %v332 = vunpack.c.l.b16 %v295
    %v333 = vunpack.c.l.b16 %v296
    %v334 = vunpack.c.l.b16 %v297
    %v335 = vunpack.c.l.b16 %v298
    %v336 = vunpack.c.l.b16 %v299
    %v337 = vunpack.c.l.b16 %v300
    %v338 = vunpack.c.l.b16 %v301
    %v339 = vunpack.c.l.b16 %v302
    %v340 = vunpack.c.l.b16 %v303
    %v341 = vpack.c.b16 %v326, %v325
    %v342 = vpack.c.b16 %v328, %v327
    %v343 = vpack.c.b16 %v330, %v329
    %v344 = vpack.c.b16 %v332, %v331
    %v345 = vpack.c.b16 %v334, %v333
    %v346 = vpack.c.b16 %v336, %v335
    %v347 = vpack.c.b16 %v338, %v337
    %v348 = vpack.c.b16 %v340, %v339
    %357 = vmatprep.subr.bf16.mxu0 0
    %358 = vmatpush1.bf16.msra.mxu0 %v341
    %359 = vmatprep.subr.bf16.mxu0 0
    %360 = vmatpush1.bf16.msra.mxu0 %v342
    %361 = vmatprep.subr.bf16.mxu0 0
    %362 = vmatpush1.bf16.msra.mxu0 %v343
    %363 = vmatprep.subr.bf16.mxu0 0
    %364 = vmatpush1.bf16.msra.mxu0 %v344
    %365 = vmatprep.subr.bf16.mxu0 0
    %366 = vmatpush1.bf16.msra.mxu0 %v345
    %367 = vmatprep.subr.bf16.mxu0 0
    %368 = vmatpush1.bf16.msra.mxu0 %v346
    %369 = vmatprep.subr.bf16.mxu0 0
    %370 = vmatpush1.bf16.msra.mxu0 %v347
    %371 = vmatprep.subr.bf16.mxu0 0
    %372 = vmatpush1.bf16.msra.mxu0 %v348
    %373 = vmatprep.subr.bf16.mxu0 0
    %374 = vmatpush1.bf16.msra.mxu0 0
    %375 = vmatprep.subr.bf16.mxu0 0
    %376 = vmatpush1.bf16.msra.mxu0 0
    %377 = vmatprep.subr.bf16.mxu0 0
    %378 = vmatpush1.bf16.msra.mxu0 0
    %379 = vmatprep.subr.bf16.mxu0 0
    %380 = vmatpush1.bf16.msra.mxu0 0
    %381 = vmatprep.subr.bf16.mxu0 0
    %382 = vmatpush1.bf16.msra.mxu0 0
    %383 = vmatprep.subr.bf16.mxu0 0
    %384 = vmatpush1.bf16.msra.mxu0 0
    %385 = vmatprep.subr.bf16.mxu0 0
    %386 = vmatpush1.bf16.msra.mxu0 0
    %387 = vmatprep.subr.bf16.mxu0 0
    %388 = vmatpush1.bf16.msra.mxu0 0
    %389 = vmatprep.mubr.bf16.mxu0 0
    %390 = vmatmul.mubr.bf16.gmra.mrb[0].mxu0 %v287
    %v391 = vpop.f32.mrb[0].mxu0
    %v392 = vadd.f32 %v308, %v391
    %v393 = vpop.f32.mrb[0].mxu0
    %v394 = vpop.f32.mrb[0].mxu0
    %v395 = vadd.f32 %v308, %v394
    %v396 = vpop.f32.mrb[0].mxu0
    %397 = vdwg.mxu0
    %v398 = vmax.f32 %v392, 0.0
    %v399 = vmax.f32 %v395, 0.0
    %v400 = vld [vmem:[%s6 + $0x3] sm:$0x1]
    %v401 = vlaneseq
    %v402 = vshrl.u32 %v401, 7
    %v403 = vsub.s32 0, %v402
    %v404 = vrot.slane %v400, %v403
    %v405 = vmul.f32 %v398, %v404
    %v406 = vmul.f32 %v399, %v404
    %407 = vadd.xlane.f32.xlu0 %v405
    %v408 = vpop.xlane.xlu0 %407
    %409 = vadd.xlane.f32.xlu0 %v406
    %v410 = vpop.xlane.xlu0 %409
    %v411 = vld [vmem:[%s6 + $0x4] sm:$0x1]
    %v412 = vlaneseq
    %v413 = vshrl.u32 %v412, 7
    %v414 = vsub.s32 0, %v413
    %v415 = vrot.slane %v411, %v414
    %v416 = vadd.f32 %v408, %v415
    %v417 = vadd.f32 %v410, %v415
    %vm418 = vcmask 7168
    %419 = vst.msk [vmem:[%s7] sm:$0xff] %vm418, %v416
    %420 = vst.msk [vmem:[%s7 + $0x8] sm:$0xff] %vm418, %v417
    // Predicated region
    $region38: #{critic_forward.1} parent=1 // pred_check
      _
    $region39: #{critic_forward.1} parent=1 // pred_check_branch
      %422 = sbr.rel (0) target = $region41
    $region40: #{critic_forward.1} parent=1 // pred_region
      _
    $region41: #{critic_forward.1} parent=1 // pred_fallthru
      _
    // Predicated region
    $region42: #{critic_forward.1} parent=1 // pred_check
      _
    $region43: #{critic_forward.1} parent=1 // pred_check_branch
      %424 = sbr.rel (0) target = $region45
    $region44: #{critic_forward.1} parent=1 // pred_region
      _
    $region45: #{critic_forward.1} parent=1 // pred_fallthru
      _
    %425 = vsyncpa [#allocation3], 1
    %426 = vsyncpa [#allocation5], 1

</llo_original>
